<compile_context>
chip_gen: v6e
topology: v6e:2x2x1
jax: 0.10.0
libtpu: 0.0.40
codegen_flags: <defaults>
</compile_context>

<pallas_src>
import functools

import jax
import jax.numpy as jnp
from jax.experimental import pallas as pl
from jax.experimental.pallas import tpu as pltpu

_LANE = 128
_ROW_ALIGN = 32     # lcm of the f32 (8), bf16 (16) and int8 (32) sublane tiles


def _cdiv(a, b):
    return -(-a // b)


def _round_up(a, b):
    return _cdiv(a, b) * b


def _default_num_splits():
    """2-way parallel grid split only on dual-TensorCore chips."""
    try:
        kind = jax.devices()[0].device_kind.lower()
    except Exception:  # no TPU visible at trace time
        return 1
    if "lite" in kind or "v5e" in kind or "v6" in kind:
        return 1                      # single TensorCore per chip
    if "v4" in kind or "v5" in kind or "v7" in kind:
        return 2                      # megacore / dual TensorCore
    return 1


def _ce_kernel(x_ref, lbl_ref, num_ref, den_ref, *, w0, w1):
    # x_ref:   (tr, 128) logits, interleaved [x0_0, x1_0, x0_1, x1_1, ...]
    # lbl_ref: (tr, 128) int8 labels: even lanes hold y in {0,1}, odd lanes and
    #          all padding hold the sentinel -1 (-> class weight 0).
    # num_ref/den_ref: (8, 128) f32 per-core partial sums (resident across j).
    j = pl.program_id(1)

    @pl.when(j == 0)
    def _init():
        num_ref[...] = jnp.zeros_like(num_ref)
        den_ref[...] = jnp.zeros_like(den_ref)

    x = x_ref[...].astype(jnp.float32)
    y = lbl_ref[...].astype(jnp.float32)

    # Neighbour on the next lane (circular).  For every even lane this is the
    # class-1 logit of the same sample; pairs never straddle a row (128 even).
    nxt = pltpu.roll(x, shift=_LANE - 1, axis=1)      # nxt[l] = x[(l + 1) % 128]
    z = (nxt - x) * (1.0 - 2.0 * y)                   # = x_other - x_true on even lanes
    # Stable softplus(z) == -log_softmax(x)[y] for the 2-class case.
    nll = jnp.maximum(z, 0.0) + jnp.log(1.0 + jnp.exp(-jnp.abs(z)))
    # Class weight; sentinel label -1 (odd / padded lanes) gives exactly 0.
    wi = jnp.where(y >= 0.0, w0 + (w1 - w0) * y, 0.0)

    tr = x.shape[0]
    num_ref[...] += jnp.sum((wi * nll).reshape(tr // 8, 8, _LANE), axis=0)
    den_ref[...] += jnp.sum(wi.reshape(tr // 8, 8, _LANE), axis=0)


def ce_loss(prediction, label, spoof_scale=1.0, bonafide_scale=9.0, *,
            max_rows_per_step=2048, num_splits=None):
    """Weighted cross-entropy identical to the PyTorch CELoss.forward (C=2)."""
    N, C = prediction.shape
    if C != 2:
        raise ValueError("CELoss kernel is specialised for C == 2")
    if num_splits is None:
        num_splits = _default_num_splits()

    w0 = float(bonafide_scale)      # weight of class 0 (bonafide)
    w1 = float(spoof_scale)        # weight of class 1 (spoof)

    # Lane-dense interleaved slab: 64 samples per (1, 128) row.
    flat = 2 * N
    rows = max(_cdiv(flat, _LANE), 1)
    per_split = max(_cdiv(rows, num_splits), 1)
    tr = min(_round_up(max_rows_per_step, _ROW_ALIGN),
             _round_up(per_split, _ROW_ALIGN))
    tr = max(tr, _ROW_ALIGN)
    j_steps = max(_cdiv(per_split, tr), 1)
    rows_total = num_splits * j_steps * tr
    pad = rows_total * _LANE - flat

    # Logits stay in their input dtype; one contiguous pad (fusable into the
    # pallas_call via allow_input_fusion), no column split.
    x_slab = jnp.pad(prediction.reshape(-1), (0, pad)).reshape(rows_total, _LANE)

    # int8 labels laid out to match the logits slab: even lanes = y, odd = -1.
    lbl_i8 = label.astype(jnp.int8)
    lbl_pair = jnp.stack([lbl_i8, jnp.full_like(lbl_i8, -1)], axis=-1).reshape(-1)
    lbl_slab = jnp.pad(lbl_pair, (0, pad),
                       constant_values=-1).reshape(rows_total, _LANE)

    kernel = functools.partial(_ce_kernel, w0=w0, w1=w1)

    out_num, out_den = pl.pallas_call(
        kernel,
        out_shape=(
            jax.ShapeDtypeStruct((num_splits * 8, _LANE), jnp.float32),
            jax.ShapeDtypeStruct((num_splits * 8, _LANE), jnp.float32),
        ),
        grid_spec=pltpu.PrefetchScalarGridSpec(
            num_scalar_prefetch=0,
            grid=(num_splits, j_steps),
            in_specs=[
                pl.BlockSpec((tr, _LANE), lambda c, j: (c * j_steps + j, 0)),
                pl.BlockSpec((tr, _LANE), lambda c, j: (c * j_steps + j, 0)),
            ],
            out_specs=(
                pl.BlockSpec((8, _LANE), lambda c, j: (c, 0)),
                pl.BlockSpec((8, _LANE), lambda c, j: (c, 0)),
            ),
        ),
        compiler_params=pltpu.CompilerParams(
            dimension_semantics=("parallel", "arbitrary"),
            allow_input_fusion=[True, True],
        ),
    )(x_slab, lbl_slab)

    # Combine per-core partials; divide exactly once.
    # TODO(synk): N == 0 / all-zero weights yields 0/0 (NaN), same as PyTorch.
    return jnp.sum(out_num) / jnp.sum(out_den)


def _ce_reference(prediction, label, spoof_scale=1.0, bonafide_scale=9.0):
    # Pure-JAX reference for sanity checking.
    x = prediction.astype(jnp.float32)
    w = jnp.array([bonafide_scale, spoof_scale], dtype=jnp.float32)
    logp = jax.nn.log_softmax(x, axis=-1)
    nll = -jnp.take_along_axis(logp, label[:, None].astype(jnp.int32), axis=-1)[:, 0]
    wi = w[label]
    return jnp.sum(wi * nll) / jnp.sum(wi)


if __name__ == "__main__":
    key = jax.random.PRNGKey(0)
    k1, k2, k3, k4 = jax.random.split(key, 4)

    # Small shapes consistent with the module: (N, C=2) logits, (N,) int labels.
    N, C = 8, 2
    prediction = jax.random.normal(k1, (N, C), dtype=jnp.float32)
    label = jax.random.randint(k2, (N,), 0, C, dtype=jnp.int32)
    loss = jax.block_until_ready(ce_loss(prediction, label))
    ref = jax.block_until_ready(_ce_reference(prediction, label))
    assert jnp.allclose(loss, ref, rtol=1e-5, atol=1e-5), (loss, ref)

    # Non-multiple-of-128 batch: exercises padding, sentinel labels and (on
    # dual-core chips) the 2-way parallel split.
    N2 = 300
    prediction2 = jax.random.normal(k3, (N2, C), dtype=jnp.float32)
    label2 = jax.random.randint(k4, (N2,), 0, C, dtype=jnp.int32)
    loss2 = jax.block_until_ready(ce_loss(prediction2, label2))
    ref2 = jax.block_until_ready(_ce_reference(prediction2, label2))
    assert jnp.allclose(loss2, ref2, rtol=1e-5, atol=1e-5), (loss2, ref2)

    print("KERNEL_OK")
</pallas_src>

<mosaic_0001>
module attributes {stable_mosaic.version = 11 : i64} {
  func.func @_ce_kernel(%arg0: i32, %arg1: i32, %arg2: memref<32x128xf32, #tpu.memory_space<vmem>>, %arg3: memref<32x128xi8, #tpu.memory_space<vmem>>, %arg4: memref<8x128xf32, #tpu.memory_space<vmem>>, %arg5: memref<8x128xf32, #tpu.memory_space<vmem>>) attributes {dimension_semantics = [#tpu.dimension_semantics<parallel>, #tpu.dimension_semantics<arbitrary>], iteration_bounds = array<i64: 1, 1>, scalar_prefetch = 0 : i64, scratch_operands = 0 : i64, tpu.core_type = #tpu.core_type<tc>, window_params = [{transform_indices = @transform_0, window_bounds = array<i64: 32, 128>}, {transform_indices = @transform_1, window_bounds = array<i64: 32, 128>}, {transform_indices = @transform_2, window_bounds = array<i64: 8, 128>}, {transform_indices = @transform_3, window_bounds = array<i64: 8, 128>}]} {
    %c0_i32 = arith.constant 0 : i32
    %0 = arith.cmpi eq, %arg1, %c0_i32 : i32
    %1 = arith.extui %0 : i1 to i32
    %c0_i32_0 = arith.constant 0 : i32
    %2 = arith.cmpi ne, %1, %c0_i32_0 : i32
    scf.if %2 {
      %cst_22 = arith.constant 0.000000e+00 : f32
      %42 = vector.broadcast %cst_22 : f32 to vector<8x128xf32>
      %c0_23 = arith.constant 0 : index
      %c0_24 = arith.constant 0 : index
      %43 = vector.load %arg4[%c0_23, %c0_24] : memref<8x128xf32, #tpu.memory_space<vmem>>, vector<8x128xf32>
      tpu.vector_store %arg4[%c0_23, %c0_24], %42 {strides = array<i32>} : memref<8x128xf32, #tpu.memory_space<vmem>>, vector<8x128xf32>,
      %cst_25 = arith.constant 0.000000e+00 : f32
      %44 = vector.broadcast %cst_25 : f32 to vector<8x128xf32>
      %c0_26 = arith.constant 0 : index
      %c0_27 = arith.constant 0 : index
      %45 = vector.load %arg5[%c0_26, %c0_27] : memref<8x128xf32, #tpu.memory_space<vmem>>, vector<8x128xf32>
      tpu.vector_store %arg5[%c0_26, %c0_27], %44 {strides = array<i32>} : memref<8x128xf32, #tpu.memory_space<vmem>>, vector<8x128xf32>,
    } else {
    }
    %c0 = arith.constant 0 : index
    %c0_1 = arith.constant 0 : index
    %3 = vector.load %arg2[%c0, %c0_1] : memref<32x128xf32, #tpu.memory_space<vmem>>, vector<32x128xf32>
    %c0_2 = arith.constant 0 : index
    %c0_3 = arith.constant 0 : index
    %4 = vector.load %arg3[%c0_2, %c0_3] : memref<32x128xi8, #tpu.memory_space<vmem>>, vector<32x128xi8>
    %5 = arith.sitofp %4 : vector<32x128xi8> to vector<32x128xf32>
    %c127_i32 = arith.constant 127 : i32
    %6 = tpu.dynamic_rotate %3 by %c127_i32 dim 1 : vector<32x128xf32>, i32 -> vector<32x128xf32>
    %7 = arith.subf %6, %3 : vector<32x128xf32>
    %cst = arith.constant 2.000000e+00 : f32
    %8 = vector.broadcast %cst : f32 to vector<32x128xf32>
    %9 = arith.mulf %8, %5 : vector<32x128xf32>
    %cst_4 = arith.constant 1.000000e+00 : f32
    %10 = vector.broadcast %cst_4 : f32 to vector<32x128xf32>
    %11 = arith.subf %10, %9 : vector<32x128xf32>
    %12 = arith.mulf %7, %11 : vector<32x128xf32>
    %cst_5 = arith.constant 0.000000e+00 : f32
    %13 = vector.broadcast %cst_5 : f32 to vector<32x128xf32>
    %14 = arith.maximumf %12, %13 : vector<32x128xf32>
    %15 = math.absf %12 : vector<32x128xf32>
    %cst_6 = arith.constant 0.000000e+00 : f32
    %16 = vector.broadcast %cst_6 : f32 to vector<32x128xf32>
    %17 = arith.subf %16, %15 : vector<32x128xf32>
    %18 = math.exp %17 : vector<32x128xf32>
    %cst_7 = arith.constant 1.000000e+00 : f32
    %19 = vector.broadcast %cst_7 : f32 to vector<32x128xf32>
    %20 = arith.addf %19, %18 : vector<32x128xf32>
    %21 = math.log %20 : vector<32x128xf32>
    %22 = arith.addf %14, %21 : vector<32x128xf32>
    %cst_8 = arith.constant 0.000000e+00 : f32
    %23 = vector.broadcast %cst_8 : f32 to vector<32x128xf32>
    %24 = arith.cmpf oge, %5, %23 : vector<32x128xf32>
    %cst_9 = arith.constant -8.000000e+00 : f32
    %25 = vector.broadcast %cst_9 : f32 to vector<32x128xf32>
    %26 = arith.mulf %25, %5 : vector<32x128xf32>
    %cst_10 = arith.constant 9.000000e+00 : f32
    %27 = vector.broadcast %cst_10 : f32 to vector<32x128xf32>
    %28 = arith.addf %27, %26 : vector<32x128xf32>
    %cst_11 = arith.constant 0.000000e+00 : f32
    %29 = vector.broadcast %cst_11 : f32 to vector<32x128xf32>
    %30 = arith.select %24, %28, %29 : vector<32x128xi1>, vector<32x128xf32>
    %c0_12 = arith.constant 0 : index
    %c0_13 = arith.constant 0 : index
    %31 = vector.load %arg4[%c0_12, %c0_13] : memref<8x128xf32, #tpu.memory_space<vmem>>, vector<8x128xf32>
    %32 = arith.mulf %30, %22 : vector<32x128xf32>
    %33 = vector.shape_cast %32 : vector<32x128xf32> to vector<4x8x128xf32>
    %cst_14 = arith.constant dense<0.000000e+00> : vector<8x128xf32>
    %34 = vector.multi_reduction <add>, %33, %cst_14 [0] : vector<4x8x128xf32> to vector<8x128xf32>
    %35 = arith.addf %31, %34 : vector<8x128xf32>
    %c0_15 = arith.constant 0 : index
    %c0_16 = arith.constant 0 : index
    %36 = vector.load %arg4[%c0_15, %c0_16] : memref<8x128xf32, #tpu.memory_space<vmem>>, vector<8x128xf32>
    tpu.vector_store %arg4[%c0_15, %c0_16], %35 {strides = array<i32>} : memref<8x128xf32, #tpu.memory_space<vmem>>, vector<8x128xf32>,
    %c0_17 = arith.constant 0 : index
    %c0_18 = arith.constant 0 : index
    %37 = vector.load %arg5[%c0_17, %c0_18] : memref<8x128xf32, #tpu.memory_space<vmem>>, vector<8x128xf32>
    %38 = vector.shape_cast %30 : vector<32x128xf32> to vector<4x8x128xf32>
    %cst_19 = arith.constant dense<0.000000e+00> : vector<8x128xf32>
    %39 = vector.multi_reduction <add>, %38, %cst_19 [0] : vector<4x8x128xf32> to vector<8x128xf32>
    %40 = arith.addf %37, %39 : vector<8x128xf32>
    %c0_20 = arith.constant 0 : index
    %c0_21 = arith.constant 0 : index
    %41 = vector.load %arg5[%c0_20, %c0_21] : memref<8x128xf32, #tpu.memory_space<vmem>>, vector<8x128xf32>
    tpu.vector_store %arg5[%c0_20, %c0_21], %40 {strides = array<i32>} : memref<8x128xf32, #tpu.memory_space<vmem>>, vector<8x128xf32>,
    return
  }
  func.func @transform_0(%arg0: i32, %arg1: i32) -> (i32, i32) {
    %c1_i32 = arith.constant 1 : i32
    %0 = arith.muli %arg0, %c1_i32 : i32
    %1 = arith.addi %0, %arg1 : i32
    %c0_i32 = arith.constant 0 : i32
    %c0_i32_0 = arith.constant 0 : i32
    return %1, %c0_i32 : i32, i32
  }
  func.func @transform_1(%arg0: i32, %arg1: i32) -> (i32, i32) {
    %c1_i32 = arith.constant 1 : i32
    %0 = arith.muli %arg0, %c1_i32 : i32
    %1 = arith.addi %0, %arg1 : i32
    %c0_i32 = arith.constant 0 : i32
    %c0_i32_0 = arith.constant 0 : i32
    return %1, %c0_i32 : i32, i32
  }
  func.func @transform_2(%arg0: i32, %arg1: i32) -> (i32, i32) {
    %c0_i32 = arith.constant 0 : i32
    %c0_i32_0 = arith.constant 0 : i32
    return %arg0, %c0_i32 : i32, i32
  }
  func.func @transform_3(%arg0: i32, %arg1: i32) -> (i32, i32) {
    %c0_i32 = arith.constant 0 : i32
    %c0_i32_0 = arith.constant 0 : i32
    return %arg0, %c0_i32 : i32, i32
  }
}

</mosaic_0001>

<llo_original>
// kernel: tpu_custom_call.1
$region0: #{tpu_custom_call.1}
  #allocation0 [shape = 'u32[]', space=smem, size = 0x4, offset = 0x4, fixed_abs, tag = 'smem constant byte address 0x4 - core index']
  #allocation1 [shape = 'u32[144,128]{1,0:T(1,128)}', space=vmem, size = 0x12000, scoped, tag = 'internal scratch']
  %s0 = inlined_call_operand.hbm [shape: f32[32,128], index: 0, kind: input, shape index: {}]
  %s1 = inlined_call_operand.hbm [shape: s8[32,128], index: 1, kind: input, shape index: {}]
  %s2 = inlined_call_operand.hbm [shape: f32[8,128], index: 2, kind: output, shape index: {0}]
  %s3 = inlined_call_operand.hbm [shape: f32[8,128], index: 3, kind: output, shape index: {1}]
  %4 = xla_tuple %s2, %s3
  %s5 = sld [smem:[#allocation0]]
  $region38: #{tpu_custom_call.1} parent=0
    _
  %s7 = ssub.s32 1, %s5
  %s8 = scalar_select 0, %s7, %s5
  $region1: #{tpu_custom_call.1} parent=0
    #allocation2 [shape = 'u8[16384]{0}', space=vmem, size = 0x4000, scoped, tag = 'input window, operand 0, single buffered']
    #allocation3 [shape = 's32[1]{0}', space=sflag, size = 0x4, scoped, tag = 'scoped memory for tpu_custom_call.1']
    #allocation4 [shape = 's32[1]{0}', space=sflag, size = 0x4, scoped, tag = 'scoped memory for tpu_custom_call.1']
    #allocation5 [shape = 'u8[4096]{0}', space=vmem, size = 0x1000, scoped, tag = 'input window, operand 1, single buffered']
    #allocation6 [shape = 's32[1]{0}', space=sflag, size = 0x4, scoped, tag = 'scoped memory for tpu_custom_call.1']
    #allocation7 [shape = 'u8[4096]{0}', space=vmem, size = 0x1000, scoped, tag = 'output window, operand 0, single buffered']
    #allocation8 [shape = 'u8[4096]{0}', space=vmem, size = 0x1000, scoped, tag = 'output window, operand 1, single buffered']
    #allocation9 [shape = 's32[1]{0}', space=sflag, size = 0x4, scoped, tag = 'scoped memory for tpu_custom_call.1']
    %9 = vsyncpa [#allocation3], 0
    %10 = vsyncpa [#allocation6], 0
    %11 = vsyncpa [#allocation4], 0
    %12 = vsyncpa [#allocation9], 0
    // Predicated region
    $region2: #{tpu_custom_call.1} parent=1 // pred_check
      _
    $region3: #{tpu_custom_call.1} parent=1 // pred_check_branch
      %14 = sbr.rel (0) target = $region5
    $region4: #{tpu_custom_call.1} parent=1 // pred_region
      %s15 = sadd.s32 0, 0
      %s16 = smul.u32 4, %s15
      %s18 = ssub.s32 512, 512
      %19 = vsyncadd [#allocation3], %s18
      %s20 = smul.addr %s16, 128
      %s21 = scalar_lea.hbm %s0, %s20
      %s22 = sshll.u32 [#allocation2], 4
      %s23 = int_to_ptr.vmem [resolvable:$true] %s22
      %28 = dma.hbm_to_vmem [thread:$0]  %s21, 512, %s23, [#allocation3], 128, 128, 8
    $region5: #{tpu_custom_call.1} parent=1 // pred_fallthru
      _
    // Predicated region
    $region6: #{tpu_custom_call.1} parent=1 // pred_check
      _
    $region7: #{tpu_custom_call.1} parent=1 // pred_check_branch
      %30 = sbr.rel (0) target = $region9
    $region8: #{tpu_custom_call.1} parent=1 // pred_region
      %s31 = sadd.s32 0, 0
      %s33 = ssub.s32 128, 128
      %34 = vsyncadd [#allocation6], %s33
      %s35 = smul.addr %s31, 128
      %s36 = scalar_lea.hbm %s1, %s35
      %s38 = sshll.u32 [#allocation5], 4
      %s39 = int_to_ptr.vmem [resolvable:$true] %s38
      %41 = dma.hbm_to_vmem [thread:$0]  %s36, 128, %s39, [#allocation6]
    $region9: #{tpu_custom_call.1} parent=1 // pred_fallthru
      _
    // Predicated region
    $region10: #{tpu_custom_call.1} parent=1 // pred_check
      _
    $region11: #{tpu_custom_call.1} parent=1 // pred_check_branch
      %43 = sbr.rel (0) target = $region13
    $region12: #{tpu_custom_call.1} parent=1 // pred_region
      %44 = dma.done [#allocation3], 512
    $region13: #{tpu_custom_call.1} parent=1 // pred_fallthru
      _
    // Predicated region
    $region14: #{tpu_custom_call.1} parent=1 // pred_check
      _
    $region15: #{tpu_custom_call.1} parent=1 // pred_check_branch
      %46 = sbr.rel (0) target = $region17
    $region16: #{tpu_custom_call.1} parent=1 // pred_region
      %47 = dma.done [#allocation6], 128
    $region17: #{tpu_custom_call.1} parent=1 // pred_fallthru
      _
    %s48 = sadd.s32 0, 0
    %s49 = smul.u32 4, %s48
    %s50 = sadd.s32 0, 0
    %p51 = scmp.eq.s32.totalorder 0, 0
    // Predicated region
    $region18: #{tpu_custom_call.1} parent=1 // pred_check
      %p52 = pneg %p51
    $region19: #{tpu_custom_call.1} parent=1 // pred_check_branch
      %54 = sbr.rel (%p52) target = $region21
    $region20: #{tpu_custom_call.1} parent=1 // pred_region
      %55 = vst [vmem:[#allocation7] sm:$0xff] 0.0
      %56 = vst [vmem:[#allocation8] sm:$0xff] 0.0
    $region21: #{tpu_custom_call.1} parent=1 // pred_fallthru
      _
    %v57 = vld [vmem:[#allocation2] sm:$0xff]
    %v58 = vld [vmem:[#allocation2 + $0x8] sm:$0xff]
    %v59 = vld [vmem:[#allocation2 + $0x10] sm:$0xff]
    %v60 = vld [vmem:[#allocation2 + $0x18] sm:$0xff]
    %v61 = vld [vmem:[#allocation5] sm:$0xff]
    %v62 = vunpack.c.0.s8 %v61
    %v63 = vunpack.c.1.s8 %v61
    %v64 = vunpack.c.2.s8 %v61
    %v65 = vunpack.c.3.s8 %v61
    %v66 = vcvt.s32.f32 %v62
    %v67 = vcvt.s32.f32 %v63
    %v68 = vcvt.s32.f32 %v64
    %v69 = vcvt.s32.f32 %v65
    %70 = vrot.lane.b32.xlu0 %v57, 127
    %v71 = vpop.permute.xlu0 %70
    %72 = vrot.lane.b32.xlu0 %v58, 127
    %v73 = vpop.permute.xlu0 %72
    %74 = vrot.lane.b32.xlu0 %v59, 127
    %v75 = vpop.permute.xlu0 %74
    %76 = vrot.lane.b32.xlu0 %v60, 127
    %v77 = vpop.permute.xlu0 %76
    %v78 = vsub.f32 %v71, %v57
    %v79 = vsub.f32 %v73, %v58
    %v80 = vsub.f32 %v75, %v59
    %v81 = vsub.f32 %v77, %v60
    %v82 = vmul.f32 %v66, 2.0
    %v83 = vmul.f32 %v67, 2.0
    %v84 = vmul.f32 %v68, 2.0
    %v85 = vmul.f32 %v69, 2.0
    %v86 = vsub.f32 1.0, %v82
    %v87 = vsub.f32 1.0, %v83
    %v88 = vsub.f32 1.0, %v84
    %v89 = vsub.f32 1.0, %v85
    %v90 = vmul.f32 %v78, %v86
    %v91 = vmul.f32 %v79, %v87
    %v92 = vmul.f32 %v80, %v88
    %v93 = vmul.f32 %v81, %v89
    %v94 = vmax.f32 %v90, 0.0
    %v95 = vmax.f32 %v91, 0.0
    %v96 = vmax.f32 %v92, 0.0
    %v97 = vmax.f32 %v93, 0.0
    %v98 = vand.u32 2147483647, %v90
    %v99 = vand.u32 2147483647, %v91
    %v100 = vand.u32 2147483647, %v92
    %v101 = vand.u32 2147483647, %v93
    %v102 = vsub.f32 0.0, %v98
    %v103 = vsub.f32 0.0, %v99
    %v104 = vsub.f32 0.0, %v100
    %v105 = vsub.f32 0.0, %v101
    %v106 = vmul.f32 %v102, 1.442695
    %v107 = vpow.pop %v106
    %v108 = vmul.f32 %v103, 1.442695
    %v109 = vpow.pop %v108
    %v110 = vmul.f32 %v104, 1.442695
    %v111 = vpow.pop %v110
    %v112 = vmul.f32 %v105, 1.442695
    %v113 = vpow.pop %v112
    %v114 = vadd.f32 %v107, 1.0
    %v115 = vadd.f32 %v109, 1.0
    %v116 = vadd.f32 %v111, 1.0
    %v117 = vadd.f32 %v113, 1.0
    %v118 = vlog2.pop %v114
    %v119 = vmul.f32 %v118, 0.6931472
    %v120 = vlog2.pop %v115
    %v121 = vmul.f32 %v120, 0.6931472
    %v122 = vlog2.pop %v116
    %v123 = vmul.f32 %v122, 0.6931472
    %v124 = vlog2.pop %v117
    %v125 = vmul.f32 %v124, 0.6931472
    %v126 = vadd.f32 %v94, %v119
    %v127 = vadd.f32 %v95, %v121
    %v128 = vadd.f32 %v96, %v123
    %v129 = vadd.f32 %v97, %v125
    %vm130 = vcmp.ge.f32.partialorder %v66, 0.0
    %vm131 = vcmp.ge.f32.partialorder %v67, 0.0
    %vm132 = vcmp.ge.f32.partialorder %v68, 0.0
    %vm133 = vcmp.ge.f32.partialorder %v69, 0.0
    %v134 = vmul.f32 %v66, -8.0
    %v135 = vmul.f32 %v67, -8.0
    %v136 = vmul.f32 %v68, -8.0
    %v137 = vmul.f32 %v69, -8.0
    %v138 = vadd.f32 %v134, 9.0
    %v139 = vadd.f32 %v135, 9.0
    %v140 = vadd.f32 %v136, 9.0
    %v141 = vadd.f32 %v137, 9.0
    %v142 = vsel %vm130, %v138, 0.0
    %v143 = vsel %vm131, %v139, 0.0
    %v144 = vsel %vm132, %v140, 0.0
    %v145 = vsel %vm133, %v141, 0.0
    %v146 = vld [vmem:[#allocation7] sm:$0xff]
    %v147 = vmul.f32 %v142, %v126
    %v148 = vmul.f32 %v143, %v127
    %v149 = vmul.f32 %v144, %v128
    %v150 = vmul.f32 %v145, %v129
    %v151 = vadd.f32 %v147, %v148
    %v152 = vadd.f32 %v151, %v149
    %v153 = vadd.f32 %v152, %v150
    %v154 = vadd.f32 %v146, %v153
    %155 = vst [vmem:[#allocation7] sm:$0xff] %v154
    %v156 = vld [vmem:[#allocation8] sm:$0xff]
    %v157 = vadd.f32 %v142, %v143
    %v158 = vadd.f32 %v157, %v144
    %v159 = vadd.f32 %v158, %v145
    %v160 = vadd.f32 %v156, %v159
    %161 = vst [vmem:[#allocation8] sm:$0xff] %v160
    // Predicated region
    $region22: #{tpu_custom_call.1} parent=1 // pred_check
      _
    $region23: #{tpu_custom_call.1} parent=1 // pred_check_branch
      %163 = sbr.rel (0) target = $region25
    $region24: #{tpu_custom_call.1} parent=1 // pred_region
      %s165 = ssub.s32 128, 128
      %166 = vsyncadd [#allocation4], %s165
      %s168 = sshll.u32 [#allocation7], 4
      %s169 = int_to_ptr.vmem [resolvable:$true] %s168
      %171 = dma.vmem_to_hbm [thread:$0]  %s169, 128, %s2, [#allocation4]
    $region25: #{tpu_custom_call.1} parent=1 // pred_fallthru
      _
    // Predicated region
    $region26: #{tpu_custom_call.1} parent=1 // pred_check
      _
    $region27: #{tpu_custom_call.1} parent=1 // pred_check_branch
      %173 = sbr.rel (0) target = $region29
    $region28: #{tpu_custom_call.1} parent=1 // pred_region
      %s175 = ssub.s32 128, 128
      %176 = vsyncadd [#allocation9], %s175
      %s178 = sshll.u32 [#allocation8], 4
      %s179 = int_to_ptr.vmem [resolvable:$true] %s178
      %181 = dma.vmem_to_hbm [thread:$0]  %s179, 128, %s3, [#allocation9]
    $region29: #{tpu_custom_call.1} parent=1 // pred_fallthru
      _
    // Predicated region
    $region30: #{tpu_custom_call.1} parent=1 // pred_check
      _
    $region31: #{tpu_custom_call.1} parent=1 // pred_check_branch
      %183 = sbr.rel (0) target = $region33
    $region32: #{tpu_custom_call.1} parent=1 // pred_region
      %184 = dma.done [#allocation4], 128
    $region33: #{tpu_custom_call.1} parent=1 // pred_fallthru
      _
    // Predicated region
    $region34: #{tpu_custom_call.1} parent=1 // pred_check
      _
    $region35: #{tpu_custom_call.1} parent=1 // pred_check_branch
      %186 = sbr.rel (0) target = $region37
    $region36: #{tpu_custom_call.1} parent=1 // pred_region
      %187 = dma.done [#allocation9], 128
    $region37: #{tpu_custom_call.1} parent=1 // pred_fallthru
      _
    %188 = vsyncpa [#allocation3], 1
    %189 = vsyncpa [#allocation6], 1
    %190 = vsyncpa [#allocation4], 1
    %191 = vsyncpa [#allocation9], 1

</llo_original>
